<compile_context>
chip_gen: v5e
topology: v5e:2x2
jax: 0.10.0
libtpu: 0.0.40
codegen_flags: <defaults>
</compile_context>

<pallas_src>
import jax
import jax.numpy as jnp
from jax import lax
from jax.experimental import pallas as pl
from jax.experimental.pallas import tpu as pltpu

LATENT_DIM = 2
N_CLASSES = 10
DIN = LATENT_DIM + N_CLASSES          # 12
HIDDEN = 256
OUT = 28 * 28                         # 784


def _cdiv(a, b):
    return -(-a // b)


def _round_up(x, m):
    return _cdiv(x, m) * m


def _decoder_kernel(z_ref, y_ref, w1z_ref, w1y_ref, b1_ref, w2_ref, b2_ref,
                    o_ref):
    # z:  (TB, 2)   f32      y:  (TB, 1)   int32
    # w1z:(2, 256)  bf16     w1y:(10, 256) bf16     b1:(1, 256) f32
    # w2: (256, 784) bf16    b2: (1, 784)  f32      o: (TB, 784) f32
    tb = z_ref.shape[0]

    # In-kernel one-hot: (TB, 10) bf16 built from the integer labels.
    lane_ids = lax.broadcasted_iota(jnp.int32, (tb, N_CLASSES), 1)
    onehot = (y_ref[...] == lane_ids).astype(jnp.bfloat16)

    # First layer: z @ W1[:2] + onehot @ W1[2:] + b1, then ReLU (f32).
    z = z_ref[...].astype(jnp.bfloat16)
    h = jnp.dot(z, w1z_ref[...], preferred_element_type=jnp.float32)
    h = h + jnp.dot(onehot, w1y_ref[...], preferred_element_type=jnp.float32)
    h = jnp.maximum(h + b1_ref[...], 0.0)

    # Second layer (bf16 inputs, f32 accumulation) + bias.
    o = jnp.dot(h.astype(jnp.bfloat16), w2_ref[...],
                preferred_element_type=jnp.float32)
    o = o + b2_ref[...]

    # sigmoid(x) == 0.5 * (tanh(0.5 * x) + 1): single EUP op per element.
    o_ref[...] = 0.5 * (jnp.tanh(0.5 * o) + 1.0)


def prepare_params(raw_params):
    """Split W1 into (latent, class) rows and cast weights to bf16."""
    w1, b1, w2, b2 = raw_params
    w1 = w1.astype(jnp.bfloat16)
    return (w1[:LATENT_DIM],                 # (2, 256)  bf16
            w1[LATENT_DIM:],                 # (10, 256) bf16
            b1.astype(jnp.float32),          # (1, 256)  f32
            w2.astype(jnp.bfloat16),         # (256, 784) bf16
            b2.astype(jnp.float32))          # (1, 784)  f32


def _choose_batch_tile(B, tb):
    steps = _cdiv(B, tb)
    # v7x megacore: keep >=2 grid steps to shard the "parallel" axis over the
    # 2 TensorCores whenever the batch is big enough for the split to be free.
    if steps < 2 and B >= 16:
        steps = 2
    TB = _round_up(_cdiv(B, steps), 8)       # f32 sublane alignment
    Bp = _round_up(B, TB)
    return TB, Bp


def mlp_decoder_forward(z, y, kernel_params, tb=1024):
    """z: (B, 2) f32, y: (B,) int labels -> (B, 1, 28, 28) f32."""
    w1z, w1y, b1, w2, b2 = kernel_params
    B = z.shape[0]

    TB, Bp = _choose_batch_tile(B, tb)

    z_in = z.astype(jnp.float32)
    y_in = y.astype(jnp.int32).reshape(B, 1)
    if Bp != B:
        z_in = jnp.pad(z_in, ((0, Bp - B), (0, 0)))
        y_in = jnp.pad(y_in, ((0, Bp - B), (0, 0)))

    cost = pl.CostEstimate(
        flops=2 * Bp * (DIN * HIDDEN + HIDDEN * OUT),
        transcendentals=Bp * OUT,
        bytes_accessed=(Bp * LATENT_DIM * 4 + Bp * 4
                        + (DIN * HIDDEN + HIDDEN * OUT) * 2
                        + (HIDDEN + OUT) * 4
                        + Bp * OUT * 4),
    )

    out_flat = pl.pallas_call(
        _decoder_kernel,
        out_shape=jax.ShapeDtypeStruct((Bp, OUT), jnp.float32),
        grid=(Bp // TB,),
        in_specs=[
            pl.BlockSpec((TB, LATENT_DIM), lambda i: (i, 0)),     # z tile
            pl.BlockSpec((TB, 1), lambda i: (i, 0)),              # labels tile
            pl.BlockSpec((LATENT_DIM, HIDDEN), lambda i: (0, 0)),  # W1[:2]
            pl.BlockSpec((N_CLASSES, HIDDEN), lambda i: (0, 0)),   # W1[2:]
            pl.BlockSpec((1, HIDDEN), lambda i: (0, 0)),           # b1
            pl.BlockSpec((HIDDEN, OUT), lambda i: (0, 0)),         # W2
            pl.BlockSpec((1, OUT), lambda i: (0, 0)),              # b2
        ],
        out_specs=pl.BlockSpec((TB, OUT), lambda i: (i, 0)),
        compiler_params=pltpu.CompilerParams(
            dimension_semantics=("parallel",)),
        cost_estimate=cost,
    )(z_in, y_in, w1z, w1y, b1, w2, b2)

    if Bp != B:
        out_flat = out_flat[:B]
    # nn.Unflatten(dim=1, (1, 28, 28))
    return out_flat.reshape(B, 1, 28, 28)


def init_params(key):
    """Deterministic init mimicking nn.Linear default (U[-1/sqrt(fan_in), ...]).

    Parameters are stored pre-transposed as (in, out), f32.
    """
    k1, k2, k3, k4 = jax.random.split(key, 4)

    bound1 = 1.0 / jnp.sqrt(jnp.float32(DIN))
    w1 = jax.random.uniform(k1, (DIN, HIDDEN), jnp.float32, -bound1, bound1)
    b1 = jax.random.uniform(k2, (1, HIDDEN), jnp.float32, -bound1, bound1)

    bound2 = 1.0 / jnp.sqrt(jnp.float32(HIDDEN))
    w2 = jax.random.uniform(k3, (HIDDEN, OUT), jnp.float32, -bound2, bound2)
    b2 = jax.random.uniform(k4, (1, OUT), jnp.float32, -bound2, bound2)
    return w1, b1, w2, b2


def _reference(z, y, raw_params):
    w1, b1, w2, b2 = raw_params
    inputs = jnp.concatenate(
        [z, jax.nn.one_hot(y, N_CLASSES, dtype=z.dtype)], axis=-1)
    h = jnp.maximum(inputs @ w1 + b1, 0.0)
    return jax.nn.sigmoid(h @ w2 + b2).reshape(z.shape[0], 1, 28, 28)


if __name__ == "__main__":
    key = jax.random.PRNGKey(0)
    kp, kz, ky, kz2, ky2 = jax.random.split(key, 5)

    raw_params = init_params(kp)
    kernel_params = prepare_params(raw_params)

    # Small batch: single grid step.
    B = 8
    z = jax.random.normal(kz, (B, LATENT_DIM), dtype=jnp.float32)
    y = jax.random.randint(ky, (B,), 0, N_CLASSES, dtype=jnp.int32)
    x_pred = mlp_decoder_forward(z, y, kernel_params)
    jax.block_until_ready(x_pred)
    ref = _reference(z, y, raw_params)
    assert x_pred.shape == (B, 1, 28, 28)
    assert jnp.allclose(x_pred, ref, atol=2e-2, rtol=0.0)

    # Ragged batch: exercises the adaptive tile (2 grid steps) + batch padding.
    B2 = 20
    z2 = jax.random.normal(kz2, (B2, LATENT_DIM), dtype=jnp.float32)
    y2 = jax.random.randint(ky2, (B2,), 0, N_CLASSES, dtype=jnp.int32)
    x_pred2 = mlp_decoder_forward(z2, y2, kernel_params)
    jax.block_until_ready(x_pred2)
    ref2 = _reference(z2, y2, raw_params)
    assert x_pred2.shape == (B2, 1, 28, 28)
    assert jnp.allclose(x_pred2, ref2, atol=2e-2, rtol=0.0)

    print("KERNEL_OK")
</pallas_src>

<mosaic_0001>
module attributes {stable_mosaic.version = 11 : i64} {
  func.func @_decoder_kernel(%arg0: i32, %arg1: memref<8x2xf32, #tpu.memory_space<vmem>>, %arg2: memref<8x1xi32, #tpu.memory_space<vmem>>, %arg3: memref<2x256xbf16, #tpu.memory_space<vmem>>, %arg4: memref<10x256xbf16, #tpu.memory_space<vmem>>, %arg5: memref<1x256xf32, #tpu.memory_space<vmem>>, %arg6: memref<256x784xbf16, #tpu.memory_space<vmem>>, %arg7: memref<1x784xf32, #tpu.memory_space<vmem>>, %arg8: memref<8x784xf32, #tpu.memory_space<vmem>>) attributes {dimension_semantics = [#tpu.dimension_semantics<parallel>], iteration_bounds = array<i64: 1>, scalar_prefetch = 0 : i64, scratch_operands = 0 : i64, tpu.core_type = #tpu.core_type<tc>, window_params = [{transform_indices = @transform_0, window_bounds = array<i64: 8, 2>}, {transform_indices = @transform_1, window_bounds = array<i64: 8, 1>}, {pipeline_mode = #tpu.pipeline_mode<synchronous>, transform_indices = @transform_2, window_bounds = array<i64: 2, 256>}, {pipeline_mode = #tpu.pipeline_mode<synchronous>, transform_indices = @transform_3, window_bounds = array<i64: 10, 256>}, {pipeline_mode = #tpu.pipeline_mode<synchronous>, transform_indices = @transform_4, window_bounds = array<i64: 1, 256>}, {pipeline_mode = #tpu.pipeline_mode<synchronous>, transform_indices = @transform_5, window_bounds = array<i64: 256, 784>}, {pipeline_mode = #tpu.pipeline_mode<synchronous>, transform_indices = @transform_6, window_bounds = array<i64: 1, 784>}, {transform_indices = @transform_7, window_bounds = array<i64: 8, 784>}]} {
    %0 = tpu.iota {dimensions = array<i32: 1>} : vector<8x10xi32>
    %c0 = arith.constant 0 : index
    %c0_0 = arith.constant 0 : index
    %1 = vector.load %arg2[%c0, %c0_0] : memref<8x1xi32, #tpu.memory_space<vmem>>, vector<8x1xi32>
    %2 = vector.broadcast %1 : vector<8x1xi32> to vector<8x10xi32>
    %3 = arith.cmpi eq, %2, %0 : vector<8x10xi32>
    %4 = arith.extui %3 : vector<8x10xi1> to vector<8x10xi32>
    %5 = arith.sitofp %4 : vector<8x10xi32> to vector<8x10xf32>
    %6 = arith.truncf %5 : vector<8x10xf32> to vector<8x10xbf16>
    %c0_1 = arith.constant 0 : index
    %c0_2 = arith.constant 0 : index
    %7 = vector.load %arg1[%c0_1, %c0_2] : memref<8x2xf32, #tpu.memory_space<vmem>>, vector<8x2xf32>
    %8 = arith.truncf %7 : vector<8x2xf32> to vector<8x2xbf16>
    %c0_3 = arith.constant 0 : index
    %c0_4 = arith.constant 0 : index
    %9 = vector.load %arg3[%c0_3, %c0_4] : memref<2x256xbf16, #tpu.memory_space<vmem>>, vector<2x256xbf16>
    %cst = arith.constant dense<0.000000e+00> : vector<8x256xf32>
    %10 = tpu.matmul %8, %9, %cst {dimension_numbers = #tpu.dot_dimension_numbers<[1], [0], [0], [1], [0, 0, 1, 1], [], []>} : vector<8x2xbf16>, vector<2x256xbf16>, vector<8x256xf32> -> vector<8x256xf32>
    %c0_5 = arith.constant 0 : index
    %c0_6 = arith.constant 0 : index
    %11 = vector.load %arg4[%c0_5, %c0_6] : memref<10x256xbf16, #tpu.memory_space<vmem>>, vector<10x256xbf16>
    %cst_7 = arith.constant dense<0.000000e+00> : vector<8x256xf32>
    %12 = tpu.matmul %6, %11, %cst_7 {dimension_numbers = #tpu.dot_dimension_numbers<[1], [0], [0], [1], [0, 0, 1, 1], [], []>} : vector<8x10xbf16>, vector<10x256xbf16>, vector<8x256xf32> -> vector<8x256xf32>
    %13 = arith.addf %10, %12 : vector<8x256xf32>
    %c0_8 = arith.constant 0 : index
    %c0_9 = arith.constant 0 : index
    %14 = vector.load %arg5[%c0_8, %c0_9] : memref<1x256xf32, #tpu.memory_space<vmem>>, vector<1x256xf32>
    %15 = vector.broadcast %14 : vector<1x256xf32> to vector<8x256xf32>
    %16 = arith.addf %13, %15 : vector<8x256xf32>
    %cst_10 = arith.constant 0.000000e+00 : f32
    %17 = vector.broadcast %cst_10 : f32 to vector<8x256xf32>
    %18 = arith.maximumf %16, %17 : vector<8x256xf32>
    %19 = arith.truncf %18 : vector<8x256xf32> to vector<8x256xbf16>
    %c0_11 = arith.constant 0 : index
    %c0_12 = arith.constant 0 : index
    %20 = vector.load %arg6[%c0_11, %c0_12] : memref<256x784xbf16, #tpu.memory_space<vmem>>, vector<256x784xbf16>
    %cst_13 = arith.constant dense<0.000000e+00> : vector<8x784xf32>
    %21 = tpu.matmul %19, %20, %cst_13 {dimension_numbers = #tpu.dot_dimension_numbers<[1], [0], [0], [1], [0, 0, 1, 1], [], []>} : vector<8x256xbf16>, vector<256x784xbf16>, vector<8x784xf32> -> vector<8x784xf32>
    %c0_14 = arith.constant 0 : index
    %c0_15 = arith.constant 0 : index
    %22 = vector.load %arg7[%c0_14, %c0_15] : memref<1x784xf32, #tpu.memory_space<vmem>>, vector<1x784xf32>
    %23 = vector.broadcast %22 : vector<1x784xf32> to vector<8x784xf32>
    %24 = arith.addf %21, %23 : vector<8x784xf32>
    %cst_16 = arith.constant 5.000000e-01 : f32
    %25 = vector.broadcast %cst_16 : f32 to vector<8x784xf32>
    %26 = arith.mulf %25, %24 : vector<8x784xf32>
    %27 = math.tanh %26 : vector<8x784xf32>
    %cst_17 = arith.constant 1.000000e+00 : f32
    %28 = vector.broadcast %cst_17 : f32 to vector<8x784xf32>
    %29 = arith.addf %27, %28 : vector<8x784xf32>
    %cst_18 = arith.constant 5.000000e-01 : f32
    %30 = vector.broadcast %cst_18 : f32 to vector<8x784xf32>
    %31 = arith.mulf %30, %29 : vector<8x784xf32>
    %c0_19 = arith.constant 0 : index
    %c0_20 = arith.constant 0 : index
    %32 = vector.load %arg8[%c0_19, %c0_20] : memref<8x784xf32, #tpu.memory_space<vmem>>, vector<8x784xf32>
    tpu.vector_store %arg8[%c0_19, %c0_20], %31 {strides = array<i32>} : memref<8x784xf32, #tpu.memory_space<vmem>>, vector<8x784xf32>,
    return
  }
  func.func @transform_0(%arg0: i32) -> (i32, i32) {
    %c0_i32 = arith.constant 0 : i32
    %c0_i32_0 = arith.constant 0 : i32
    return %arg0, %c0_i32 : i32, i32
  }
  func.func @transform_1(%arg0: i32) -> (i32, i32) {
    %c0_i32 = arith.constant 0 : i32
    %c0_i32_0 = arith.constant 0 : i32
    return %arg0, %c0_i32 : i32, i32
  }
  func.func @transform_2(%arg0: i32) -> (i32, i32) {
    %c0_i32 = arith.constant 0 : i32
    %c0_i32_0 = arith.constant 0 : i32
    %c0_i32_1 = arith.constant 0 : i32
    return %c0_i32, %c0_i32_0 : i32, i32
  }
  func.func @transform_3(%arg0: i32) -> (i32, i32) {
    %c0_i32 = arith.constant 0 : i32
    %c0_i32_0 = arith.constant 0 : i32
    %c0_i32_1 = arith.constant 0 : i32
    return %c0_i32, %c0_i32_0 : i32, i32
  }
  func.func @transform_4(%arg0: i32) -> (i32, i32) {
    %c0_i32 = arith.constant 0 : i32
    %c0_i32_0 = arith.constant 0 : i32
    %c0_i32_1 = arith.constant 0 : i32
    return %c0_i32, %c0_i32_0 : i32, i32
  }
  func.func @transform_5(%arg0: i32) -> (i32, i32) {
    %c0_i32 = arith.constant 0 : i32
    %c0_i32_0 = arith.constant 0 : i32
    %c0_i32_1 = arith.constant 0 : i32
    return %c0_i32, %c0_i32_0 : i32, i32
  }
  func.func @transform_6(%arg0: i32) -> (i32, i32) {
    %c0_i32 = arith.constant 0 : i32
    %c0_i32_0 = arith.constant 0 : i32
    %c0_i32_1 = arith.constant 0 : i32
    return %c0_i32, %c0_i32_0 : i32, i32
  }
  func.func @transform_7(%arg0: i32) -> (i32, i32) {
    %c0_i32 = arith.constant 0 : i32
    %c0_i32_0 = arith.constant 0 : i32
    return %arg0, %c0_i32 : i32, i32
  }
}

</mosaic_0001>

<llo_original>
// kernel: tpu_custom_call.1
$region0: #{tpu_custom_call.1}
  #allocation0 [shape = 'u32[]', space=smem, size = 0x4, offset = 0x4, fixed_abs, tag = 'smem constant byte address 0x4 - core index']
  #allocation1 [shape = 'u32[72,128]{1,0:T(1,128)}', space=vmem, size = 0x9000, scoped, tag = 'internal scratch']
  %s0 = inlined_call_operand.vmem [shape: f32[8,2], index: 0, kind: input, shape index: {}]
  %s1 = inlined_call_operand.vmem [shape: s32[8,1], index: 1, kind: input, shape index: {}]
  %s2 = inlined_call_operand.vmem [shape: bf16[2,256], index: 2, kind: input, shape index: {}]
  %s3 = inlined_call_operand.vmem [shape: bf16[10,256], index: 3, kind: input, shape index: {}]
  %s4 = inlined_call_operand.vmem [shape: f32[1,256], index: 4, kind: input, shape index: {}]
  %s5 = inlined_call_operand.vmem [shape: bf16[256,784], index: 5, kind: input, shape index: {}]
  %s6 = inlined_call_operand.vmem [shape: f32[1,784], index: 6, kind: input, shape index: {}]
  %s7 = inlined_call_operand.hbm [shape: f32[8,784], index: 7, kind: output, shape index: {}]
  %s8 = sld [smem:[#allocation0]]
  $region38: #{tpu_custom_call.1} parent=0
    _
  %s10 = ssub.s32 1, %s8
  %s11 = scalar_select 0, %s10, %s8
  $region1: #{tpu_custom_call.1} parent=0
    #allocation2 [shape = 'u8[28672]{0}', space=vmem, size = 0x7000, scoped, tag = 'output window, operand 0, single buffered']
    #allocation3 [shape = 's32[1]{0}', space=sflag, size = 0x4, scoped, tag = 'scoped memory for tpu_custom_call.1']
    %12 = vsyncpa [#allocation3], 0
    // Predicated region
    $region2: #{tpu_custom_call.1} parent=1 // pred_check
      _
    $region3: #{tpu_custom_call.1} parent=1 // pred_check_branch
      %14 = sbr.rel (0) target = $region5
    $region4: #{tpu_custom_call.1} parent=1 // pred_region
      _
    $region5: #{tpu_custom_call.1} parent=1 // pred_fallthru
      _
    // Predicated region
    $region6: #{tpu_custom_call.1} parent=1 // pred_check
      _
    $region7: #{tpu_custom_call.1} parent=1 // pred_check_branch
      %16 = sbr.rel (0) target = $region9
    $region8: #{tpu_custom_call.1} parent=1 // pred_region
      _
    $region9: #{tpu_custom_call.1} parent=1 // pred_fallthru
      _
    // Predicated region
    $region10: #{tpu_custom_call.1} parent=1 // pred_check
      _
    $region11: #{tpu_custom_call.1} parent=1 // pred_check_branch
      %18 = sbr.rel (0) target = $region13
    $region12: #{tpu_custom_call.1} parent=1 // pred_region
      _
    $region13: #{tpu_custom_call.1} parent=1 // pred_fallthru
      _
    // Predicated region
    $region14: #{tpu_custom_call.1} parent=1 // pred_check
      _
    $region15: #{tpu_custom_call.1} parent=1 // pred_check_branch
      %20 = sbr.rel (0) target = $region17
    $region16: #{tpu_custom_call.1} parent=1 // pred_region
      _
    $region17: #{tpu_custom_call.1} parent=1 // pred_fallthru
      _
    // Predicated region
    $region18: #{tpu_custom_call.1} parent=1 // pred_check
      _
    $region19: #{tpu_custom_call.1} parent=1 // pred_check_branch
      %22 = sbr.rel (0) target = $region21
    $region20: #{tpu_custom_call.1} parent=1 // pred_region
      _
    $region21: #{tpu_custom_call.1} parent=1 // pred_fallthru
      _
    // Predicated region
    $region22: #{tpu_custom_call.1} parent=1 // pred_check
      _
    $region23: #{tpu_custom_call.1} parent=1 // pred_check_branch
      %24 = sbr.rel (0) target = $region25
    $region24: #{tpu_custom_call.1} parent=1 // pred_region
      _
    $region25: #{tpu_custom_call.1} parent=1 // pred_fallthru
      _
    // Predicated region
    $region26: #{tpu_custom_call.1} parent=1 // pred_check
      _
    $region27: #{tpu_custom_call.1} parent=1 // pred_check_branch
      %26 = sbr.rel (0) target = $region29
    $region28: #{tpu_custom_call.1} parent=1 // pred_region
      _
    $region29: #{tpu_custom_call.1} parent=1 // pred_fallthru
      _
    %v28 = vlaneseq
    %v29 = vand.u32 %v28, 127
    %v30 = vld [vmem:[%s1] sm:$0xff]
    %31 = vset.pattern.permute.xlu0 0
    %32 = vperm.xlu0 %31, %v30
    %v33 = vpop.permute.xlu0 %32
    %vm34 = vcmp.eq.s32.totalorder %v33, %v29
    %v35 = vsel %vm34, 1, 0
    %v36 = vcvt.s32.f32 %v35
    %v37 = vpack.c.bf16 %v36, %v36
    %v38 = vld [vmem:[%s0] sm:$0xff]
    %v39 = vpack.c.bf16 %v38, %v38
    %v40 = vld [vmem:[%s2] sm:$0x3]
    %v41 = vld [vmem:[%s3] sm:$0xff]
    %v42 = vld [vmem:[%s3 + $0x8] sm:$0x11]
    %v45 = vunpack.c.l.b16 %v41
    %v46 = vunpack.c.h.b16 %v41
    %v47 = vunpack.c.l.b16 %v42
    %v48 = vunpack.c.h.b16 %v42
    %v49 = vpack.c.b16 %v47, %v45
    %v50 = vpack.c.b16 %v48, %v46
    %vm51 = vcmask 80896
    %v53 = vsel %vm51, %v37, 0
    %vm55 = vcmask 1044480
    %v57 = vsel %vm55, %v49, 0
    %v60 = vsel %vm55, %v50, 0
    %62 = vmatpush.bf16.msra.mxu0 0
    %63 = vmatpush.bf16.msra.mxu0 0
    %64 = vmatpush.bf16.msra.mxu0 0
    %65 = vmatpush.bf16.msra.mxu0 0
    %66 = vmatpush.bf16.msra.mxu0 0
    %67 = vmatpush.bf16.msra.mxu0 0
    %68 = vmatpush.bf16.msra.mxu0 0
    %69 = vmatpush.bf16.msra.mxu0 %v57
    %70 = vmatmul.bf16.gmra.mxu0 %v53
    %v71 = vpop.f32.mrf.mxu0
    %v72 = vadd.f32 0.0, %v71
    %v73 = vpop.f32.mrf.mxu0
    %74 = vdwg.mxu0
    %75 = vmatpush.bf16.msra.mxu0 0
    %76 = vmatpush.bf16.msra.mxu0 0
    %77 = vmatpush.bf16.msra.mxu0 0
    %78 = vmatpush.bf16.msra.mxu0 0
    %79 = vmatpush.bf16.msra.mxu0 0
    %80 = vmatpush.bf16.msra.mxu0 0
    %81 = vmatpush.bf16.msra.mxu0 0
    %82 = vmatpush.bf16.msra.mxu0 %v60
    %83 = vmatmul.bf16.gmra.mxu0 %v53
    %v84 = vpop.f32.mrf.mxu0
    %v85 = vadd.f32 0.0, %v84
    %v86 = vpop.f32.mrf.mxu0
    %87 = vdwg.mxu0
    %89 = vst [vmem:[#allocation1] ss:$9 sm:$0xff] %v40
    %v90 = vld [vmem:[#allocation1] sm:$0xff]
    %v91 = vld [vmem:[#allocation1 + $0x9] sm:$0xff]
    %vm92 = vcmask 15360
    %v94 = vsel %vm92, %v39, 0
    %vm96 = vcmask 1040384
    %v97 = vsel %vm96, %v90, 0
    %v99 = vsel %vm96, %v91, 0
    %101 = vmatpush.bf16.msra.mxu0 0
    %102 = vmatpush.bf16.msra.mxu0 0
    %103 = vmatpush.bf16.msra.mxu0 0
    %104 = vmatpush.bf16.msra.mxu0 0
    %105 = vmatpush.bf16.msra.mxu0 0
    %106 = vmatpush.bf16.msra.mxu0 0
    %107 = vmatpush.bf16.msra.mxu0 0
    %108 = vmatpush.bf16.msra.mxu0 %v97
    %109 = vmatmul.bf16.gmra.mxu0 %v94
    %v110 = vpop.f32.mrf.mxu0
    %v111 = vadd.f32 %v72, %v110
    %v112 = vpop.f32.mrf.mxu0
    %113 = vdwg.mxu0
    %114 = vmatpush.bf16.msra.mxu0 0
    %115 = vmatpush.bf16.msra.mxu0 0
    %116 = vmatpush.bf16.msra.mxu0 0
    %117 = vmatpush.bf16.msra.mxu0 0
    %118 = vmatpush.bf16.msra.mxu0 0
    %119 = vmatpush.bf16.msra.mxu0 0
    %120 = vmatpush.bf16.msra.mxu0 0
    %121 = vmatpush.bf16.msra.mxu0 %v99
    %122 = vmatmul.bf16.gmra.mxu0 %v94
    %v123 = vpop.f32.mrf.mxu0
    %v124 = vadd.f32 %v85, %v123
    %v125 = vpop.f32.mrf.mxu0
    %126 = vdwg.mxu0
    %v127 = vld [vmem:[%s4] sm:$0x3]
    %v129 = vperm.slane %v127, 0
    %v130 = vperm.slane %v127, 1
    %v133 = vadd.f32 %v111, %v129
    %v134 = vadd.f32 %v124, %v130
    %v135 = vmax.f32 %v133, 0.0
    %v136 = vmax.f32 %v134, 0.0
    %v137 = vpack.c.bf16 %v135, %v135
    %v138 = vpack.c.bf16 %v136, %v136
    %v139 = vld [vmem:[%s5] sm:$0xff]
    %v140 = vld [vmem:[%s5 + $0x8] sm:$0xff]
    %v141 = vld [vmem:[%s5 + $0x10] sm:$0xff]
    %v142 = vld [vmem:[%s5 + $0x18] sm:$0xf]
    %v143 = vld [vmem:[%s5 + $0x1c] sm:$0xff]
    %v144 = vld [vmem:[%s5 + $0x24] sm:$0xff]
    %v145 = vld [vmem:[%s5 + $0x2c] sm:$0xff]
    %v146 = vld [vmem:[%s5 + $0x34] sm:$0xf]
    %v147 = vld [vmem:[%s5 + $0x38] sm:$0xff]
    %v148 = vld [vmem:[%s5 + $0x40] sm:$0xff]
    %v149 = vld [vmem:[%s5 + $0x48] sm:$0xff]
    %v150 = vld [vmem:[%s5 + $0x50] sm:$0xf]
    %v151 = vld [vmem:[%s5 + $0x54] sm:$0xff]
    %v152 = vld [vmem:[%s5 + $0x5c] sm:$0xff]
    %v153 = vld [vmem:[%s5 + $0x64] sm:$0xff]
    %v154 = vld [vmem:[%s5 + $0x6c] sm:$0xf]
    %v155 = vld [vmem:[%s5 + $0x70] sm:$0xff]
    %v156 = vld [vmem:[%s5 + $0x78] sm:$0xff]
    %v157 = vld [vmem:[%s5 + $0x80] sm:$0xff]
    %v158 = vld [vmem:[%s5 + $0x88] sm:$0xf]
    %v159 = vld [vmem:[%s5 + $0x8c] sm:$0xff]
    %v160 = vld [vmem:[%s5 + $0x94] sm:$0xff]
    %v161 = vld [vmem:[%s5 + $0x9c] sm:$0xff]
    %v162 = vld [vmem:[%s5 + $0xa4] sm:$0xf]
    %v163 = vld [vmem:[%s5 + $0xa8] sm:$0xff]
    %v164 = vld [vmem:[%s5 + $0xb0] sm:$0xff]
    %v165 = vld [vmem:[%s5 + $0xb8] sm:$0xff]
    %v166 = vld [vmem:[%s5 + $0xc0] sm:$0xf]
    %v167 = vld [vmem:[%s5 + $0xc4] sm:$0xff]
    %v168 = vld [vmem:[%s5 + $0xcc] sm:$0xff]
    %v169 = vld [vmem:[%s5 + $0xd4] sm:$0xff]
    %v170 = vld [vmem:[%s5 + $0xdc] sm:$0xf]
    %v171 = vld [vmem:[%s5 + $0xe0] sm:$0xff]
    %v172 = vld [vmem:[%s5 + $0xe8] sm:$0xff]
    %v173 = vld [vmem:[%s5 + $0xf0] sm:$0xff]
    %v174 = vld [vmem:[%s5 + $0xf8] sm:$0xf]
    %v175 = vld [vmem:[%s5 + $0xfc] sm:$0xff]
    %v176 = vld [vmem:[%s5 + $0x104] sm:$0xff]
    %v177 = vld [vmem:[%s5 + $0x10c] sm:$0xff]
    %v178 = vld [vmem:[%s5 + $0x114] sm:$0xf]
    %v179 = vld [vmem:[%s5 + $0x118] sm:$0xff]
    %v180 = vld [vmem:[%s5 + $0x120] sm:$0xff]
    %v181 = vld [vmem:[%s5 + $0x128] sm:$0xff]
    %v182 = vld [vmem:[%s5 + $0x130] sm:$0xf]
    %v183 = vld [vmem:[%s5 + $0x134] sm:$0xff]
    %v184 = vld [vmem:[%s5 + $0x13c] sm:$0xff]
    %v185 = vld [vmem:[%s5 + $0x144] sm:$0xff]
    %v186 = vld [vmem:[%s5 + $0x14c] sm:$0xf]
    %v187 = vld [vmem:[%s5 + $0x150] sm:$0xff]
    %v188 = vld [vmem:[%s5 + $0x158] sm:$0xff]
    %v189 = vld [vmem:[%s5 + $0x160] sm:$0xff]
    %v190 = vld [vmem:[%s5 + $0x168] sm:$0xf]
    %v191 = vld [vmem:[%s5 + $0x16c] sm:$0xff]
    %v192 = vld [vmem:[%s5 + $0x174] sm:$0xff]
    %v193 = vld [vmem:[%s5 + $0x17c] sm:$0xff]
    %v194 = vld [vmem:[%s5 + $0x184] sm:$0xf]
    %v195 = vld [vmem:[%s5 + $0x188] sm:$0xff]
    %v196 = vld [vmem:[%s5 + $0x190] sm:$0xff]
    %v197 = vld [vmem:[%s5 + $0x198] sm:$0xff]
    %v198 = vld [vmem:[%s5 + $0x1a0] sm:$0xf]
    %v199 = vld [vmem:[%s5 + $0x1a4] sm:$0xff]
    %v200 = vld [vmem:[%s5 + $0x1ac] sm:$0xff]
    %v201 = vld [vmem:[%s5 + $0x1b4] sm:$0xff]
    %v202 = vld [vmem:[%s5 + $0x1bc] sm:$0xf]
    %v203 = vld [vmem:[%s5 + $0x1c0] sm:$0xff]
    %v204 = vld [vmem:[%s5 + $0x1c8] sm:$0xff]
    %v205 = vld [vmem:[%s5 + $0x1d0] sm:$0xff]
    %v206 = vld [vmem:[%s5 + $0x1d8] sm:$0xf]
    %v207 = vld [vmem:[%s5 + $0x1dc] sm:$0xff]
    %v208 = vld [vmem:[%s5 + $0x1e4] sm:$0xff]
    %v209 = vld [vmem:[%s5 + $0x1ec] sm:$0xff]
    %v210 = vld [vmem:[%s5 + $0x1f4] sm:$0xf]
    %v211 = vld [vmem:[%s5 + $0x1f8] sm:$0xff]
    %v212 = vld [vmem:[%s5 + $0x200] sm:$0xff]
    %v213 = vld [vmem:[%s5 + $0x208] sm:$0xff]
    %v214 = vld [vmem:[%s5 + $0x210] sm:$0xf]
    %v215 = vld [vmem:[%s5 + $0x214] sm:$0xff]
    %v216 = vld [vmem:[%s5 + $0x21c] sm:$0xff]
    %v217 = vld [vmem:[%s5 + $0x224] sm:$0xff]
    %v218 = vld [vmem:[%s5 + $0x22c] sm:$0xf]
    %v219 = vld [vmem:[%s5 + $0x230] sm:$0xff]
    %v220 = vld [vmem:[%s5 + $0x238] sm:$0xff]
    %v221 = vld [vmem:[%s5 + $0x240] sm:$0xff]
    %v222 = vld [vmem:[%s5 + $0x248] sm:$0xf]
    %v223 = vld [vmem:[%s5 + $0x24c] sm:$0xff]
    %v224 = vld [vmem:[%s5 + $0x254] sm:$0xff]
    %v225 = vld [vmem:[%s5 + $0x25c] sm:$0xff]
    %v226 = vld [vmem:[%s5 + $0x264] sm:$0xf]
    %v227 = vld [vmem:[%s5 + $0x268] sm:$0xff]
    %v228 = vld [vmem:[%s5 + $0x270] sm:$0xff]
    %v229 = vld [vmem:[%s5 + $0x278] sm:$0xff]
    %v230 = vld [vmem:[%s5 + $0x280] sm:$0xf]
    %v231 = vld [vmem:[%s5 + $0x284] sm:$0xff]
    %v232 = vld [vmem:[%s5 + $0x28c] sm:$0xff]
    %v233 = vld [vmem:[%s5 + $0x294] sm:$0xff]
    %v234 = vld [vmem:[%s5 + $0x29c] sm:$0xf]
    %v235 = vld [vmem:[%s5 + $0x2a0] sm:$0xff]
    %v236 = vld [vmem:[%s5 + $0x2a8] sm:$0xff]
    %v237 = vld [vmem:[%s5 + $0x2b0] sm:$0xff]
    %v238 = vld [vmem:[%s5 + $0x2b8] sm:$0xf]
    %v239 = vld [vmem:[%s5 + $0x2bc] sm:$0xff]
    %v240 = vld [vmem:[%s5 + $0x2c4] sm:$0xff]
    %v241 = vld [vmem:[%s5 + $0x2cc] sm:$0xff]
    %v242 = vld [vmem:[%s5 + $0x2d4] sm:$0xf]
    %v243 = vld [vmem:[%s5 + $0x2d8] sm:$0xff]
    %v244 = vld [vmem:[%s5 + $0x2e0] sm:$0xff]
    %v245 = vld [vmem:[%s5 + $0x2e8] sm:$0xff]
    %v246 = vld [vmem:[%s5 + $0x2f0] sm:$0xf]
    %v247 = vld [vmem:[%s5 + $0x2f4] sm:$0xff]
    %v248 = vld [vmem:[%s5 + $0x2fc] sm:$0xff]
    %v249 = vld [vmem:[%s5 + $0x304] sm:$0xff]
    %v250 = vld [vmem:[%s5 + $0x30c] sm:$0xf]
    %v251 = vld [vmem:[%s5 + $0x310] sm:$0xff]
    %v252 = vld [vmem:[%s5 + $0x318] sm:$0xff]
    %v253 = vld [vmem:[%s5 + $0x320] sm:$0xff]
    %v254 = vld [vmem:[%s5 + $0x328] sm:$0xf]
    %v255 = vld [vmem:[%s5 + $0x32c] sm:$0xff]
    %v256 = vld [vmem:[%s5 + $0x334] sm:$0xff]
    %v257 = vld [vmem:[%s5 + $0x33c] sm:$0xff]
    %v258 = vld [vmem:[%s5 + $0x344] sm:$0xf]
    %v259 = vld [vmem:[%s5 + $0x348] sm:$0xff]
    %v260 = vld [vmem:[%s5 + $0x350] sm:$0xff]
    %v261 = vld [vmem:[%s5 + $0x358] sm:$0xff]
    %v262 = vld [vmem:[%s5 + $0x360] sm:$0xf]
    %v263 = vld [vmem:[%s5 + $0x364] sm:$0xff]
    %v264 = vld [vmem:[%s5 + $0x36c] sm:$0xff]
    %v265 = vld [vmem:[%s5 + $0x374] sm:$0xff]
    %v266 = vld [vmem:[%s5 + $0x37c] sm:$0xf]
    %v267 = vld [vmem:[%s6] sm:$0x7f]
    %v269 = vperm.slane %v267, 0
    %v270 = vperm.slane %v267, 1
    %v271 = vperm.slane %v267, 2
    %v272 = vperm.slane %v267, 3
    %v273 = vperm.slane %v267, 4
    %v274 = vperm.slane %v267, 5
    %v275 = vperm.slane %v267, 6
    %v411 = vunpack.c.l.b16 %v139
    %v412 = vunpack.c.h.b16 %v139
    %v413 = vunpack.c.l.b16 %v140
    %v414 = vunpack.c.h.b16 %v140
    %v415 = vunpack.c.l.b16 %v141
    %v416 = vunpack.c.h.b16 %v141
    %v417 = vunpack.c.l.b16 %v142
    %v418 = vunpack.c.l.b16 %v143
    %v419 = vunpack.c.h.b16 %v143
    %v420 = vunpack.c.l.b16 %v144
    %v421 = vunpack.c.h.b16 %v144
    %v422 = vunpack.c.l.b16 %v145
    %v423 = vunpack.c.h.b16 %v145
    %v424 = vunpack.c.l.b16 %v146
    %v425 = vunpack.c.l.b16 %v147
    %v426 = vunpack.c.h.b16 %v147
    %v427 = vunpack.c.l.b16 %v148
    %v428 = vunpack.c.h.b16 %v148
    %v429 = vunpack.c.l.b16 %v149
    %v430 = vunpack.c.h.b16 %v149
    %v431 = vunpack.c.l.b16 %v150
    %v432 = vunpack.c.l.b16 %v151
    %v433 = vunpack.c.h.b16 %v151
    %v434 = vunpack.c.l.b16 %v152
    %v435 = vunpack.c.h.b16 %v152
    %v436 = vunpack.c.l.b16 %v153
    %v437 = vunpack.c.h.b16 %v153
    %v438 = vunpack.c.l.b16 %v154
    %v439 = vunpack.c.l.b16 %v155
    %v440 = vunpack.c.h.b16 %v155
    %v441 = vunpack.c.l.b16 %v156
    %v442 = vunpack.c.h.b16 %v156
    %v443 = vunpack.c.l.b16 %v157
    %v444 = vunpack.c.h.b16 %v157
    %v445 = vunpack.c.l.b16 %v158
    %v446 = vunpack.c.l.b16 %v159
    %v447 = vunpack.c.h.b16 %v159
    %v448 = vunpack.c.l.b16 %v160
    %v449 = vunpack.c.h.b16 %v160
    %v450 = vunpack.c.l.b16 %v161
    %v451 = vunpack.c.h.b16 %v161
    %v452 = vunpack.c.l.b16 %v162
    %v453 = vunpack.c.l.b16 %v163
    %v454 = vunpack.c.h.b16 %v163
    %v455 = vunpack.c.l.b16 %v164
    %v456 = vunpack.c.h.b16 %v164
    %v457 = vunpack.c.l.b16 %v165
    %v458 = vunpack.c.h.b16 %v165
    %v459 = vunpack.c.l.b16 %v166
    %v460 = vunpack.c.l.b16 %v167
    %v461 = vunpack.c.h.b16 %v167
    %v462 = vunpack.c.l.b16 %v168
    %v463 = vunpack.c.h.b16 %v168
    %v464 = vunpack.c.l.b16 %v169
    %v465 = vunpack.c.h.b16 %v169
    %v466 = vunpack.c.l.b16 %v170
    %v467 = vunpack.c.l.b16 %v171
    %v468 = vunpack.c.h.b16 %v171
    %v469 = vunpack.c.l.b16 %v172
    %v470 = vunpack.c.h.b16 %v172
    %v471 = vunpack.c.l.b16 %v173
    %v472 = vunpack.c.h.b16 %v173
    %v473 = vunpack.c.l.b16 %v174
    %v474 = vunpack.c.l.b16 %v175
    %v475 = vunpack.c.h.b16 %v175
    %v476 = vunpack.c.l.b16 %v176
    %v477 = vunpack.c.h.b16 %v176
    %v478 = vunpack.c.l.b16 %v177
    %v479 = vunpack.c.h.b16 %v177
    %v480 = vunpack.c.l.b16 %v178
    %v481 = vunpack.c.l.b16 %v179
    %v482 = vunpack.c.h.b16 %v179
    %v483 = vunpack.c.l.b16 %v180
    %v484 = vunpack.c.h.b16 %v180
    %v485 = vunpack.c.l.b16 %v181
    %v486 = vunpack.c.h.b16 %v181
    %v487 = vunpack.c.l.b16 %v182
    %v488 = vunpack.c.l.b16 %v183
    %v489 = vunpack.c.h.b16 %v183
    %v490 = vunpack.c.l.b16 %v184
    %v491 = vunpack.c.h.b16 %v184
    %v492 = vunpack.c.l.b16 %v185
    %v493 = vunpack.c.h.b16 %v185
    %v494 = vunpack.c.l.b16 %v186
    %v495 = vunpack.c.l.b16 %v187
    %v496 = vunpack.c.h.b16 %v187
    %v497 = vunpack.c.l.b16 %v188
    %v498 = vunpack.c.h.b16 %v188
    %v499 = vunpack.c.l.b16 %v189
    %v500 = vunpack.c.h.b16 %v189
    %v501 = vunpack.c.l.b16 %v190
    %v502 = vunpack.c.l.b16 %v191
    %v503 = vunpack.c.h.b16 %v191
    %v504 = vunpack.c.l.b16 %v192
    %v505 = vunpack.c.h.b16 %v192
    %v506 = vunpack.c.l.b16 %v193
    %v507 = vunpack.c.h.b16 %v193
    %v508 = vunpack.c.l.b16 %v194
    %v509 = vunpack.c.l.b16 %v195
    %v510 = vunpack.c.h.b16 %v195
    %v511 = vunpack.c.l.b16 %v196
    %v512 = vunpack.c.h.b16 %v196
    %v513 = vunpack.c.l.b16 %v197
    %v514 = vunpack.c.h.b16 %v197
    %v515 = vunpack.c.l.b16 %v198
    %v516 = vunpack.c.l.b16 %v199
    %v517 = vunpack.c.h.b16 %v199
    %v518 = vunpack.c.l.b16 %v200
    %v519 = vunpack.c.h.b16 %v200
    %v520 = vunpack.c.l.b16 %v201
    %v521 = vunpack.c.h.b16 %v201
    %v522 = vunpack.c.l.b16 %v202
    %v523 = vunpack.c.l.b16 %v203
    %v524 = vunpack.c.h.b16 %v203
    %v525 = vunpack.c.l.b16 %v204
    %v526 = vunpack.c.h.b16 %v204
    %v527 = vunpack.c.l.b16 %v205
    %v528 = vunpack.c.h.b16 %v205
    %v529 = vunpack.c.l.b16 %v206
    %v530 = vunpack.c.l.b16 %v207
    %v531 = vunpack.c.h.b16 %v207
    %v532 = vunpack.c.l.b16 %v208
    %v533 = vunpack.c.h.b16 %v208
    %v534 = vunpack.c.l.b16 %v209
    %v535 = vunpack.c.h.b16 %v209
    %v536 = vunpack.c.l.b16 %v210
    %v537 = vunpack.c.l.b16 %v211
    %v538 = vunpack.c.h.b16 %v211
    %v539 = vunpack.c.l.b16 %v212
    %v540 = vunpack.c.h.b16 %v212
    %v541 = vunpack.c.l.b16 %v213
    %v542 = vunpack.c.h.b16 %v213
    %v543 = vunpack.c.l.b16 %v214
    %v544 = vunpack.c.l.b16 %v215
    %v545 = vunpack.c.h.b16 %v215
    %v546 = vunpack.c.l.b16 %v216
    %v547 = vunpack.c.h.b16 %v216
    %v548 = vunpack.c.l.b16 %v217
    %v549 = vunpack.c.h.b16 %v217
    %v550 = vunpack.c.l.b16 %v218
    %v551 = vunpack.c.l.b16 %v219
    %v552 = vunpack.c.h.b16 %v219
    %v553 = vunpack.c.l.b16 %v220
    %v554 = vunpack.c.h.b16 %v220
    %v555 = vunpack.c.l.b16 %v221
    %v556 = vunpack.c.h.b16 %v221
    %v557 = vunpack.c.l.b16 %v222
    %v558 = vunpack.c.l.b16 %v223
    %v559 = vunpack.c.h.b16 %v223
    %v560 = vunpack.c.l.b16 %v224
    %v561 = vunpack.c.h.b16 %v224
    %v562 = vunpack.c.l.b16 %v225
    %v563 = vunpack.c.h.b16 %v225
    %v564 = vunpack.c.l.b16 %v226
    %v565 = vunpack.c.l.b16 %v227
    %v566 = vunpack.c.h.b16 %v227
    %v567 = vunpack.c.l.b16 %v228
    %v568 = vunpack.c.h.b16 %v228
    %v569 = vunpack.c.l.b16 %v229
    %v570 = vunpack.c.h.b16 %v229
    %v571 = vunpack.c.l.b16 %v230
    %v572 = vunpack.c.l.b16 %v231
    %v573 = vunpack.c.h.b16 %v231
    %v574 = vunpack.c.l.b16 %v232
    %v575 = vunpack.c.h.b16 %v232
    %v576 = vunpack.c.l.b16 %v233
    %v577 = vunpack.c.h.b16 %v233
    %v578 = vunpack.c.l.b16 %v234
    %v579 = vunpack.c.l.b16 %v235
    %v580 = vunpack.c.h.b16 %v235
    %v581 = vunpack.c.l.b16 %v236
    %v582 = vunpack.c.h.b16 %v236
    %v583 = vunpack.c.l.b16 %v237
    %v584 = vunpack.c.h.b16 %v237
    %v585 = vunpack.c.l.b16 %v238
    %v586 = vunpack.c.l.b16 %v239
    %v587 = vunpack.c.h.b16 %v239
    %v588 = vunpack.c.l.b16 %v240
    %v589 = vunpack.c.h.b16 %v240
    %v590 = vunpack.c.l.b16 %v241
    %v591 = vunpack.c.h.b16 %v241
    %v592 = vunpack.c.l.b16 %v242
    %v593 = vunpack.c.l.b16 %v243
    %v594 = vunpack.c.h.b16 %v243
    %v595 = vunpack.c.l.b16 %v244
    %v596 = vunpack.c.h.b16 %v244
    %v597 = vunpack.c.l.b16 %v245
    %v598 = vunpack.c.h.b16 %v245
    %v599 = vunpack.c.l.b16 %v246
    %v600 = vunpack.c.l.b16 %v247
    %v601 = vunpack.c.h.b16 %v247
    %v602 = vunpack.c.l.b16 %v248
    %v603 = vunpack.c.h.b16 %v248
    %v604 = vunpack.c.l.b16 %v249
    %v605 = vunpack.c.h.b16 %v249
    %v606 = vunpack.c.l.b16 %v250
    %v607 = vunpack.c.l.b16 %v251
    %v608 = vunpack.c.h.b16 %v251
    %v609 = vunpack.c.l.b16 %v252
    %v610 = vunpack.c.h.b16 %v252
    %v611 = vunpack.c.l.b16 %v253
    %v612 = vunpack.c.h.b16 %v253
    %v613 = vunpack.c.l.b16 %v254
    %v614 = vunpack.c.l.b16 %v255
    %v615 = vunpack.c.h.b16 %v255
    %v616 = vunpack.c.l.b16 %v256
    %v617 = vunpack.c.h.b16 %v256
    %v618 = vunpack.c.l.b16 %v257
    %v619 = vunpack.c.h.b16 %v257
    %v620 = vunpack.c.l.b16 %v258
    %v621 = vunpack.c.l.b16 %v259
    %v622 = vunpack.c.h.b16 %v259
    %v623 = vunpack.c.l.b16 %v260
    %v624 = vunpack.c.h.b16 %v260
    %v625 = vunpack.c.l.b16 %v261
    %v626 = vunpack.c.h.b16 %v261
    %v627 = vunpack.c.l.b16 %v262
    %v628 = vunpack.c.l.b16 %v263
    %v629 = vunpack.c.h.b16 %v263
    %v630 = vunpack.c.l.b16 %v264
    %v631 = vunpack.c.h.b16 %v264
    %v632 = vunpack.c.l.b16 %v265
    %v633 = vunpack.c.h.b16 %v265
    %v634 = vunpack.c.l.b16 %v266
    %v635 = vpack.c.b16 %v418, %v411
    %v636 = vpack.c.b16 %v419, %v412
    %v637 = vpack.c.b16 %v420, %v413
    %v638 = vpack.c.b16 %v421, %v414
    %v639 = vpack.c.b16 %v422, %v415
    %v640 = vpack.c.b16 %v423, %v416
    %v641 = vpack.c.b16 %v424, %v417
    %v642 = vpack.c.b16 %v432, %v425
    %v643 = vpack.c.b16 %v433, %v426
    %v644 = vpack.c.b16 %v434, %v427
    %v645 = vpack.c.b16 %v435, %v428
    %v646 = vpack.c.b16 %v436, %v429
    %v647 = vpack.c.b16 %v437, %v430
    %v648 = vpack.c.b16 %v438, %v431
    %v649 = vpack.c.b16 %v446, %v439
    %v650 = vpack.c.b16 %v447, %v440
    %v651 = vpack.c.b16 %v448, %v441
    %v652 = vpack.c.b16 %v449, %v442
    %v653 = vpack.c.b16 %v450, %v443
    %v654 = vpack.c.b16 %v451, %v444
    %v655 = vpack.c.b16 %v452, %v445
    %v656 = vpack.c.b16 %v460, %v453
    %v657 = vpack.c.b16 %v461, %v454
    %v658 = vpack.c.b16 %v462, %v455
    %v659 = vpack.c.b16 %v463, %v456
    %v660 = vpack.c.b16 %v464, %v457
    %v661 = vpack.c.b16 %v465, %v458
    %v662 = vpack.c.b16 %v466, %v459
    %v663 = vpack.c.b16 %v474, %v467
    %v664 = vpack.c.b16 %v475, %v468
    %v665 = vpack.c.b16 %v476, %v469
    %v666 = vpack.c.b16 %v477, %v470
    %v667 = vpack.c.b16 %v478, %v471
    %v668 = vpack.c.b16 %v479, %v472
    %v669 = vpack.c.b16 %v480, %v473
    %v670 = vpack.c.b16 %v488, %v481
    %v671 = vpack.c.b16 %v489, %v482
    %v672 = vpack.c.b16 %v490, %v483
    %v673 = vpack.c.b16 %v491, %v484
    %v674 = vpack.c.b16 %v492, %v485
    %v675 = vpack.c.b16 %v493, %v486
    %v676 = vpack.c.b16 %v494, %v487
    %v677 = vpack.c.b16 %v502, %v495
    %v678 = vpack.c.b16 %v503, %v496
    %v679 = vpack.c.b16 %v504, %v497
    %v680 = vpack.c.b16 %v505, %v498
    %v681 = vpack.c.b16 %v506, %v499
    %v682 = vpack.c.b16 %v507, %v500
    %v683 = vpack.c.b16 %v508, %v501
    %v684 = vpack.c.b16 %v516, %v509
    %v685 = vpack.c.b16 %v517, %v510
    %v686 = vpack.c.b16 %v518, %v511
    %v687 = vpack.c.b16 %v519, %v512
    %v688 = vpack.c.b16 %v520, %v513
    %v689 = vpack.c.b16 %v521, %v514
    %v690 = vpack.c.b16 %v522, %v515
    %v691 = vpack.c.b16 %v530, %v523
    %v692 = vpack.c.b16 %v531, %v524
    %v693 = vpack.c.b16 %v532, %v525
    %v694 = vpack.c.b16 %v533, %v526
    %v695 = vpack.c.b16 %v534, %v527
    %v696 = vpack.c.b16 %v535, %v528
    %v697 = vpack.c.b16 %v536, %v529
    %v698 = vpack.c.b16 %v544, %v537
    %v699 = vpack.c.b16 %v545, %v538
    %v700 = vpack.c.b16 %v546, %v539
    %v701 = vpack.c.b16 %v547, %v540
    %v702 = vpack.c.b16 %v548, %v541
    %v703 = vpack.c.b16 %v549, %v542
    %v704 = vpack.c.b16 %v550, %v543
    %v705 = vpack.c.b16 %v558, %v551
    %v706 = vpack.c.b16 %v559, %v552
    %v707 = vpack.c.b16 %v560, %v553
    %v708 = vpack.c.b16 %v561, %v554
    %v709 = vpack.c.b16 %v562, %v555
    %v710 = vpack.c.b16 %v563, %v556
    %v711 = vpack.c.b16 %v564, %v557
    %v712 = vpack.c.b16 %v572, %v565
    %v713 = vpack.c.b16 %v573, %v566
    %v714 = vpack.c.b16 %v574, %v567
    %v715 = vpack.c.b16 %v575, %v568
    %v716 = vpack.c.b16 %v576, %v569
    %v717 = vpack.c.b16 %v577, %v570
    %v718 = vpack.c.b16 %v578, %v571
    %v719 = vpack.c.b16 %v586, %v579
    %v720 = vpack.c.b16 %v587, %v580
    %v721 = vpack.c.b16 %v588, %v581
    %v722 = vpack.c.b16 %v589, %v582
    %v723 = vpack.c.b16 %v590, %v583
    %v724 = vpack.c.b16 %v591, %v584
    %v725 = vpack.c.b16 %v592, %v585
    %v726 = vpack.c.b16 %v600, %v593
    %v727 = vpack.c.b16 %v601, %v594
    %v728 = vpack.c.b16 %v602, %v595
    %v729 = vpack.c.b16 %v603, %v596
    %v730 = vpack.c.b16 %v604, %v597
    %v731 = vpack.c.b16 %v605, %v598
    %v732 = vpack.c.b16 %v606, %v599
    %v733 = vpack.c.b16 %v614, %v607
    %v734 = vpack.c.b16 %v615, %v608
    %v735 = vpack.c.b16 %v616, %v609
    %v736 = vpack.c.b16 %v617, %v610
    %v737 = vpack.c.b16 %v618, %v611
    %v738 = vpack.c.b16 %v619, %v612
    %v739 = vpack.c.b16 %v620, %v613
    %v740 = vpack.c.b16 %v628, %v621
    %v741 = vpack.c.b16 %v629, %v622
    %v742 = vpack.c.b16 %v630, %v623
    %v743 = vpack.c.b16 %v631, %v624
    %v744 = vpack.c.b16 %v632, %v625
    %v745 = vpack.c.b16 %v633, %v626
    %v746 = vpack.c.b16 %v634, %v627
    %859 = vmatpush.bf16.msra.mxu0 %v684
    %860 = vmatpush.bf16.msra.mxu0 %v677
    %861 = vmatpush.bf16.msra.mxu0 %v670
    %862 = vmatpush.bf16.msra.mxu0 %v663
    %863 = vmatpush.bf16.msra.mxu0 %v656
    %864 = vmatpush.bf16.msra.mxu0 %v649
    %865 = vmatpush.bf16.msra.mxu0 %v642
    %866 = vmatpush.bf16.msra.mxu0 %v635
    %867 = vmatmul.bf16.gmra.mxu0 %v137
    %v868 = vpop.f32.mrf.mxu0
    %v869 = vadd.f32 %v269, %v868
    %v870 = vpop.f32.mrf.mxu0
    %871 = vdwg.mxu0
    %872 = vmatpush.bf16.msra.mxu0 %v740
    %873 = vmatpush.bf16.msra.mxu0 %v733
    %874 = vmatpush.bf16.msra.mxu0 %v726
    %875 = vmatpush.bf16.msra.mxu0 %v719
    %876 = vmatpush.bf16.msra.mxu0 %v712
    %877 = vmatpush.bf16.msra.mxu0 %v705
    %878 = vmatpush.bf16.msra.mxu0 %v698
    %879 = vmatpush.bf16.msra.mxu0 %v691
    %880 = vmatmul.bf16.gmra.mxu0 %v138
    %v881 = vpop.f32.mrf.mxu0
    %v882 = vadd.f32 %v869, %v881
    %v883 = vpop.f32.mrf.mxu0
    %884 = vdwg.mxu0
    %885 = vmatpush.bf16.msra.mxu0 %v685
    %886 = vmatpush.bf16.msra.mxu0 %v678
    %887 = vmatpush.bf16.msra.mxu0 %v671
    %888 = vmatpush.bf16.msra.mxu0 %v664
    %889 = vmatpush.bf16.msra.mxu0 %v657
    %890 = vmatpush.bf16.msra.mxu0 %v650
    %891 = vmatpush.bf16.msra.mxu0 %v643
    %892 = vmatpush.bf16.msra.mxu0 %v636
    %893 = vmatmul.bf16.gmra.mxu0 %v137
    %v894 = vpop.f32.mrf.mxu0
    %v895 = vadd.f32 %v270, %v894
    %v896 = vpop.f32.mrf.mxu0
    %897 = vdwg.mxu0
    %898 = vmatpush.bf16.msra.mxu0 %v741
    %899 = vmatpush.bf16.msra.mxu0 %v734
    %900 = vmatpush.bf16.msra.mxu0 %v727
    %901 = vmatpush.bf16.msra.mxu0 %v720
    %902 = vmatpush.bf16.msra.mxu0 %v713
    %903 = vmatpush.bf16.msra.mxu0 %v706
    %904 = vmatpush.bf16.msra.mxu0 %v699
    %905 = vmatpush.bf16.msra.mxu0 %v692
    %906 = vmatmul.bf16.gmra.mxu0 %v138
    %v907 = vpop.f32.mrf.mxu0
    %v908 = vadd.f32 %v895, %v907
    %v909 = vpop.f32.mrf.mxu0
    %910 = vdwg.mxu0
    %911 = vmatpush.bf16.msra.mxu0 %v686
    %912 = vmatpush.bf16.msra.mxu0 %v679
    %913 = vmatpush.bf16.msra.mxu0 %v672
    %914 = vmatpush.bf16.msra.mxu0 %v665
    %915 = vmatpush.bf16.msra.mxu0 %v658
    %916 = vmatpush.bf16.msra.mxu0 %v651
    %917 = vmatpush.bf16.msra.mxu0 %v644
    %918 = vmatpush.bf16.msra.mxu0 %v637
    %919 = vmatmul.bf16.gmra.mxu0 %v137
    %v920 = vpop.f32.mrf.mxu0
    %v921 = vadd.f32 %v271, %v920
    %v922 = vpop.f32.mrf.mxu0
    %923 = vdwg.mxu0
    %924 = vmatpush.bf16.msra.mxu0 %v742
    %925 = vmatpush.bf16.msra.mxu0 %v735
    %926 = vmatpush.bf16.msra.mxu0 %v728
    %927 = vmatpush.bf16.msra.mxu0 %v721
    %928 = vmatpush.bf16.msra.mxu0 %v714
    %929 = vmatpush.bf16.msra.mxu0 %v707
    %930 = vmatpush.bf16.msra.mxu0 %v700
    %931 = vmatpush.bf16.msra.mxu0 %v693
    %932 = vmatmul.bf16.gmra.mxu0 %v138
    %v933 = vpop.f32.mrf.mxu0
    %v934 = vadd.f32 %v921, %v933
    %v935 = vpop.f32.mrf.mxu0
    %936 = vdwg.mxu0
    %937 = vmatpush.bf16.msra.mxu0 %v687
    %938 = vmatpush.bf16.msra.mxu0 %v680
    %939 = vmatpush.bf16.msra.mxu0 %v673
    %940 = vmatpush.bf16.msra.mxu0 %v666
    %941 = vmatpush.bf16.msra.mxu0 %v659
    %942 = vmatpush.bf16.msra.mxu0 %v652
    %943 = vmatpush.bf16.msra.mxu0 %v645
    %944 = vmatpush.bf16.msra.mxu0 %v638
    %945 = vmatmul.bf16.gmra.mxu0 %v137
    %v946 = vpop.f32.mrf.mxu0
    %v947 = vadd.f32 %v272, %v946
    %v948 = vpop.f32.mrf.mxu0
    %949 = vdwg.mxu0
    %950 = vmatpush.bf16.msra.mxu0 %v743
    %951 = vmatpush.bf16.msra.mxu0 %v736
    %952 = vmatpush.bf16.msra.mxu0 %v729
    %953 = vmatpush.bf16.msra.mxu0 %v722
    %954 = vmatpush.bf16.msra.mxu0 %v715
    %955 = vmatpush.bf16.msra.mxu0 %v708
    %956 = vmatpush.bf16.msra.mxu0 %v701
    %957 = vmatpush.bf16.msra.mxu0 %v694
    %958 = vmatmul.bf16.gmra.mxu0 %v138
    %v959 = vpop.f32.mrf.mxu0
    %v960 = vadd.f32 %v947, %v959
    %v961 = vpop.f32.mrf.mxu0
    %962 = vdwg.mxu0
    %963 = vmatpush.bf16.msra.mxu0 %v688
    %964 = vmatpush.bf16.msra.mxu0 %v681
    %965 = vmatpush.bf16.msra.mxu0 %v674
    %966 = vmatpush.bf16.msra.mxu0 %v667
    %967 = vmatpush.bf16.msra.mxu0 %v660
    %968 = vmatpush.bf16.msra.mxu0 %v653
    %969 = vmatpush.bf16.msra.mxu0 %v646
    %970 = vmatpush.bf16.msra.mxu0 %v639
    %971 = vmatmul.bf16.gmra.mxu0 %v137
    %v972 = vpop.f32.mrf.mxu0
    %v973 = vadd.f32 %v273, %v972
    %v974 = vpop.f32.mrf.mxu0
    %975 = vdwg.mxu0
    %976 = vmatpush.bf16.msra.mxu0 %v744
    %977 = vmatpush.bf16.msra.mxu0 %v737
    %978 = vmatpush.bf16.msra.mxu0 %v730
    %979 = vmatpush.bf16.msra.mxu0 %v723
    %980 = vmatpush.bf16.msra.mxu0 %v716
    %981 = vmatpush.bf16.msra.mxu0 %v709
    %982 = vmatpush.bf16.msra.mxu0 %v702
    %983 = vmatpush.bf16.msra.mxu0 %v695
    %984 = vmatmul.bf16.gmra.mxu0 %v138
    %v985 = vpop.f32.mrf.mxu0
    %v986 = vadd.f32 %v973, %v985
    %v987 = vpop.f32.mrf.mxu0
    %988 = vdwg.mxu0
    %989 = vmatpush.bf16.msra.mxu0 %v689
    %990 = vmatpush.bf16.msra.mxu0 %v682
    %991 = vmatpush.bf16.msra.mxu0 %v675
    %992 = vmatpush.bf16.msra.mxu0 %v668
    %993 = vmatpush.bf16.msra.mxu0 %v661
    %994 = vmatpush.bf16.msra.mxu0 %v654
    %995 = vmatpush.bf16.msra.mxu0 %v647
    %996 = vmatpush.bf16.msra.mxu0 %v640
    %997 = vmatmul.bf16.gmra.mxu0 %v137
    %v998 = vpop.f32.mrf.mxu0
    %v999 = vadd.f32 %v274, %v998
    %v1000 = vpop.f32.mrf.mxu0
    %1001 = vdwg.mxu0
    %1002 = vmatpush.bf16.msra.mxu0 %v745
    %1003 = vmatpush.bf16.msra.mxu0 %v738
    %1004 = vmatpush.bf16.msra.mxu0 %v731
    %1005 = vmatpush.bf16.msra.mxu0 %v724
    %1006 = vmatpush.bf16.msra.mxu0 %v717
    %1007 = vmatpush.bf16.msra.mxu0 %v710
    %1008 = vmatpush.bf16.msra.mxu0 %v703
    %1009 = vmatpush.bf16.msra.mxu0 %v696
    %1010 = vmatmul.bf16.gmra.mxu0 %v138
    %v1011 = vpop.f32.mrf.mxu0
    %v1012 = vadd.f32 %v999, %v1011
    %v1013 = vpop.f32.mrf.mxu0
    %1014 = vdwg.mxu0
    %1015 = vmatpush.bf16.msra.mxu0 %v690
    %1016 = vmatpush.bf16.msra.mxu0 %v683
    %1017 = vmatpush.bf16.msra.mxu0 %v676
    %1018 = vmatpush.bf16.msra.mxu0 %v669
    %1019 = vmatpush.bf16.msra.mxu0 %v662
    %1020 = vmatpush.bf16.msra.mxu0 %v655
    %1021 = vmatpush.bf16.msra.mxu0 %v648
    %1022 = vmatpush.bf16.msra.mxu0 %v641
    %1023 = vmatmul.bf16.gmra.mxu0 %v137
    %v1024 = vpop.f32.mrf.mxu0
    %v1025 = vadd.f32 %v275, %v1024
    %v1026 = vpop.f32.mrf.mxu0
    %1027 = vdwg.mxu0
    %1028 = vmatpush.bf16.msra.mxu0 %v746
    %1029 = vmatpush.bf16.msra.mxu0 %v739
    %1030 = vmatpush.bf16.msra.mxu0 %v732
    %1031 = vmatpush.bf16.msra.mxu0 %v725
    %1032 = vmatpush.bf16.msra.mxu0 %v718
    %1033 = vmatpush.bf16.msra.mxu0 %v711
    %1034 = vmatpush.bf16.msra.mxu0 %v704
    %1035 = vmatpush.bf16.msra.mxu0 %v697
    %1036 = vmatmul.bf16.gmra.mxu0 %v138
    %v1037 = vpop.f32.mrf.mxu0
    %v1038 = vadd.f32 %v1025, %v1037
    %v1039 = vpop.f32.mrf.mxu0
    %1040 = vdwg.mxu0
    %v1041 = vmul.f32 %v882, 0.5
    %v1042 = vmul.f32 %v908, 0.5
    %v1043 = vmul.f32 %v934, 0.5
    %v1044 = vmul.f32 %v960, 0.5
    %v1045 = vmul.f32 %v986, 0.5
    %v1046 = vmul.f32 %v1012, 0.5
    %v1047 = vmul.f32 %v1038, 0.5
    %v1048 = vtanh.pop %v1041
    %v1049 = vtanh.pop %v1042
    %v1050 = vtanh.pop %v1043
    %v1051 = vtanh.pop %v1044
    %v1052 = vtanh.pop %v1045
    %v1053 = vtanh.pop %v1046
    %v1054 = vtanh.pop %v1047
    %v1055 = vadd.f32 %v1048, 1.0
    %v1056 = vadd.f32 %v1049, 1.0
    %v1057 = vadd.f32 %v1050, 1.0
    %v1058 = vadd.f32 %v1051, 1.0
    %v1059 = vadd.f32 %v1052, 1.0
    %v1060 = vadd.f32 %v1053, 1.0
    %v1061 = vadd.f32 %v1054, 1.0
    %v1062 = vmul.f32 %v1055, 0.5
    %v1063 = vmul.f32 %v1056, 0.5
    %v1064 = vmul.f32 %v1057, 0.5
    %v1065 = vmul.f32 %v1058, 0.5
    %v1066 = vmul.f32 %v1059, 0.5
    %v1067 = vmul.f32 %v1060, 0.5
    %v1068 = vmul.f32 %v1061, 0.5
    %1069 = vst [vmem:[#allocation2] sm:$0xff] %v1062
    %1070 = vst [vmem:[#allocation2 + $0x8] sm:$0xff] %v1063
    %1071 = vst [vmem:[#allocation2 + $0x10] sm:$0xff] %v1064
    %1072 = vst [vmem:[#allocation2 + $0x18] sm:$0xff] %v1065
    %1073 = vst [vmem:[#allocation2 + $0x20] sm:$0xff] %v1066
    %1074 = vst [vmem:[#allocation2 + $0x28] sm:$0xff] %v1067
    %vm1075 = vcmask 130048
    %1076 = vst.msk [vmem:[#allocation2 + $0x30] sm:$0xff] %vm1075, %v1068
    // Predicated region
    $region30: #{tpu_custom_call.1} parent=1 // pred_check
      _
    $region31: #{tpu_custom_call.1} parent=1 // pred_check_branch
      %1078 = sbr.rel (0) target = $region33
    $region32: #{tpu_custom_call.1} parent=1 // pred_region
      %1080 = vsyncadd [#allocation3], 0
      %s1082 = sshll.u32 [#allocation2], 4
      %s1083 = int_to_ptr.vmem [resolvable:$true] %s1082
      %s1084 = sshll.u32 %s7, 4
      %s1085 = int_to_ptr.hbm [resolvable:$true] %s1084
      %1087 = dma.vmem_to_hbm [thread:$0]  %s1083, 896, %s1085, [#allocation3]
    $region33: #{tpu_custom_call.1} parent=1 // pred_fallthru
      _
    // Predicated region
    $region34: #{tpu_custom_call.1} parent=1 // pred_check
      _
    $region35: #{tpu_custom_call.1} parent=1 // pred_check_branch
      %1089 = sbr.rel (0) target = $region37
    $region36: #{tpu_custom_call.1} parent=1 // pred_region
      %1091 = dma.done [#allocation3], 896
    $region37: #{tpu_custom_call.1} parent=1 // pred_fallthru
      _
    %1092 = vsyncpa [#allocation3], 1

</llo_original>
